<compile_context>
chip_gen: v5e
topology: v5e:2x2
jax: 0.10.0
libtpu: 0.0.40
codegen_flags: <defaults>
</compile_context>

<pallas_src>
import functools

import jax
import jax.numpy as jnp
from jax.experimental import pallas as pl
from jax.experimental.pallas import tpu as pltpu


def _mha_kernel(x_ref, w_all_ref, b_all_ref, wc_ref, bc_ref, out_ref,
                *, num_heads, qk_size, zv_size):
    """Full multi-head attention + compress linear for the whole batch in one shot."""
    B, S, X = x_ref.shape
    H, QK, ZV = num_heads, qk_size, zv_size
    scale = 1.0 / (QK ** 0.5)

    # Flatten batch*seq so the fused projection sees B*S sublanes at once.
    x2 = x_ref[...].reshape(B * S, X)                                     # (B*S, X)

    # One fused, lane-dense projection for all heads and all of Q/K/V: 192 output lanes.
    qkv = jnp.dot(x2, w_all_ref[...],
                  preferred_element_type=jnp.float32) + b_all_ref[...]    # (B*S, H*(2QK+ZV))

    q_all = qkv[:, :H * QK].reshape(B, S, H * QK)
    k_all = qkv[:, H * QK:2 * H * QK].reshape(B, S, H * QK)
    v_all = qkv[:, 2 * H * QK:].reshape(B, S, H * ZV)

    wc = wc_ref[...]                                                      # (H*ZV, ZV)
    acc = jnp.zeros((B * S, ZV), jnp.float32)

    # Static loop over heads (H is small). Attention stays per-batch, per-head.
    for h in range(H):
        qh = q_all[:, :, h * QK:(h + 1) * QK]                             # (B, S, QK)
        kh = k_all[:, :, h * QK:(h + 1) * QK]                             # (B, S, QK)
        vh = v_all[:, :, h * ZV:(h + 1) * ZV]                             # (B, S, ZV)

        e = jnp.einsum('bqd,bkd->bqk', qh, kh,
                       preferred_element_type=jnp.float32) * scale        # (B, S, S)
        # numerically stable softmax over the last axis (matches torch.softmax)
        e = e - jnp.max(e, axis=-1, keepdims=True)
        p = jnp.exp(e)
        p = p * pl.reciprocal(jnp.sum(p, axis=-1, keepdims=True), approx=True)

        zh = jnp.einsum('bqk,bkd->bqd', p, vh,
                        preferred_element_type=jnp.float32)               # (B, S, ZV)

        # Accumulated compress == concat(z_heads) @ Wc ; keeps z in vregs, no scratch.
        acc = acc + jnp.dot(zh.reshape(B * S, ZV), wc[h * ZV:(h + 1) * ZV, :],
                            preferred_element_type=jnp.float32)

    out = acc + bc_ref[...]                                               # (B*S, ZV)
    out_ref[...] = out.reshape(B, S, ZV).astype(out_ref.dtype)
    # TODO(synk): for large S, switch the per-head (S,S) softmax to a KV-tiled online
    # softmax (flash pattern) and add a grid so work also shards across v7x's 2 TCs.


@jax.jit
def multi_attention_heads(x, wq, bq, wk, bk, wv, bv, wc, bc):
    B, S, X = x.shape
    H, _, QK = wq.shape
    ZV = wv.shape[2]

    # Fuse all per-head projection weights into one lane-dense operand (layout plumbing,
    # done once outside the kernel): columns are [Q heads | K heads | V heads], head-major.
    w_all = jnp.concatenate([
        jnp.moveaxis(wq, 0, 1).reshape(X, H * QK),
        jnp.moveaxis(wk, 0, 1).reshape(X, H * QK),
        jnp.moveaxis(wv, 0, 1).reshape(X, H * ZV),
    ], axis=-1)                                                           # (X, H*(2QK+ZV))
    b_all = jnp.concatenate([
        bq.reshape(1, H * QK),
        bk.reshape(1, H * QK),
        bv.reshape(1, H * ZV),
    ], axis=-1)                                                           # (1, H*(2QK+ZV))

    kernel = functools.partial(_mha_kernel, num_heads=H, qk_size=QK, zv_size=ZV)
    vmem_spec = pl.BlockSpec(memory_space=pltpu.MemorySpace.VMEM)

    return pl.pallas_call(
        kernel,
        out_shape=jax.ShapeDtypeStruct((B, S, ZV), x.dtype),
        # No grid: the whole (tiny) problem is one invocation -> no per-step overhead,
        # no double-buffered weight residency (v7x VMEM friendly).
        in_specs=[vmem_spec] * 5,
        out_specs=vmem_spec,
        compiler_params=pltpu.CompilerParams(vmem_limit_bytes=32 * 1024 * 1024),
    )(x, w_all, b_all, wc, bc)


def _reference(x, wq, bq, wk, bk, wv, bv, wc, bc):
    """Plain-JAX reference mirroring the PyTorch forward pass."""
    outs = []
    H = wq.shape[0]
    qk = wq.shape[2]
    for h in range(H):
        q = x @ wq[h] + bq[h]
        k = x @ wk[h] + bk[h]
        v = x @ wv[h] + bv[h]
        e = (q @ jnp.swapaxes(k, -1, -2)) / jnp.sqrt(jnp.float32(qk))
        p = jax.nn.softmax(e, axis=-1)
        outs.append(p @ v)
    super_z = jnp.concatenate(outs, axis=-1)
    return super_z @ wc + bc[0]


if __name__ == "__main__":
    # small shapes consistent with the module's forward
    B, S = 2, 8
    X_SIZE, QK_SIZE, ZV_SIZE, NUM_HEADS = 32, 16, 16, 4

    key = jax.random.PRNGKey(0)
    ks = jax.random.split(key, 9)
    x = jax.random.normal(ks[0], (B, S, X_SIZE), dtype=jnp.float32)

    # deterministic synthetic parameters (nn.Linear-equivalent shapes, stored transposed)
    wq = 0.1 * jax.random.normal(ks[1], (NUM_HEADS, X_SIZE, QK_SIZE), dtype=jnp.float32)
    bq = 0.1 * jax.random.normal(ks[2], (NUM_HEADS, 1, QK_SIZE), dtype=jnp.float32)
    wk = 0.1 * jax.random.normal(ks[3], (NUM_HEADS, X_SIZE, QK_SIZE), dtype=jnp.float32)
    bk = 0.1 * jax.random.normal(ks[4], (NUM_HEADS, 1, QK_SIZE), dtype=jnp.float32)
    wv = 0.1 * jax.random.normal(ks[5], (NUM_HEADS, X_SIZE, ZV_SIZE), dtype=jnp.float32)
    bv = 0.1 * jax.random.normal(ks[6], (NUM_HEADS, 1, ZV_SIZE), dtype=jnp.float32)
    wc = 0.1 * jax.random.normal(ks[7], (NUM_HEADS * ZV_SIZE, ZV_SIZE), dtype=jnp.float32)
    bc = 0.1 * jax.random.normal(ks[8], (1, ZV_SIZE), dtype=jnp.float32)

    out = multi_attention_heads(x, wq, bq, wk, bk, wv, bv, wc, bc)
    out = jax.block_until_ready(out)

    ref = _reference(x, wq, bq, wk, bk, wv, bv, wc, bc)
    assert out.shape == (B, S, ZV_SIZE)
    # tolerance slightly looser than before to accommodate the EUP approx reciprocal
    assert jnp.allclose(out, ref, atol=1e-3, rtol=1e-3), "mismatch vs. reference"

    print("KERNEL_OK")
</pallas_src>

<mosaic_0001>
module attributes {stable_mosaic.version = 11 : i64} {
  func.func @_mha_kernel(%arg0: memref<2x8x32xf32, #tpu.memory_space<vmem>>, %arg1: memref<32x192xf32, #tpu.memory_space<vmem>>, %arg2: memref<1x192xf32, #tpu.memory_space<vmem>>, %arg3: memref<64x16xf32, #tpu.memory_space<vmem>>, %arg4: memref<1x16xf32, #tpu.memory_space<vmem>>, %arg5: memref<2x8x16xf32, #tpu.memory_space<vmem>>) attributes {dimension_semantics = [], scalar_prefetch = 0 : i64, scratch_operands = 0 : i64, tpu.core_type = #tpu.core_type<tc>} {
    %c0 = arith.constant 0 : index
    %c0_0 = arith.constant 0 : index
    %c0_1 = arith.constant 0 : index
    %0 = vector.load %arg0[%c0, %c0_0, %c0_1] : memref<2x8x32xf32, #tpu.memory_space<vmem>>, vector<2x8x32xf32>
    %1 = vector.shape_cast %0 : vector<2x8x32xf32> to vector<16x32xf32>
    %c0_2 = arith.constant 0 : index
    %c0_3 = arith.constant 0 : index
    %2 = vector.load %arg1[%c0_2, %c0_3] : memref<32x192xf32, #tpu.memory_space<vmem>>, vector<32x192xf32>
    %cst = arith.constant dense<0.000000e+00> : vector<16x192xf32>
    %3 = tpu.matmul %1, %2, %cst {dimension_numbers = #tpu.dot_dimension_numbers<[1], [0], [0], [1], [0, 0, 1, 1], [], []>} : vector<16x32xf32>, vector<32x192xf32>, vector<16x192xf32> -> vector<16x192xf32>
    %c0_4 = arith.constant 0 : index
    %c0_5 = arith.constant 0 : index
    %4 = vector.load %arg2[%c0_4, %c0_5] : memref<1x192xf32, #tpu.memory_space<vmem>>, vector<1x192xf32>
    %5 = vector.broadcast %4 : vector<1x192xf32> to vector<16x192xf32>
    %6 = arith.addf %3, %5 : vector<16x192xf32>
    %7 = vector.extract_strided_slice %6 {offsets = [0, 0], sizes = [16, 64], strides = [1, 1]} : vector<16x192xf32> to vector<16x64xf32>
    %8 = vector.shape_cast %7 : vector<16x64xf32> to vector<2x8x64xf32>
    %9 = vector.extract_strided_slice %6 {offsets = [0, 64], sizes = [16, 64], strides = [1, 1]} : vector<16x192xf32> to vector<16x64xf32>
    %10 = vector.shape_cast %9 : vector<16x64xf32> to vector<2x8x64xf32>
    %11 = vector.extract_strided_slice %6 {offsets = [0, 128], sizes = [16, 64], strides = [1, 1]} : vector<16x192xf32> to vector<16x64xf32>
    %12 = vector.shape_cast %11 : vector<16x64xf32> to vector<2x8x64xf32>
    %c0_6 = arith.constant 0 : index
    %c0_7 = arith.constant 0 : index
    %13 = vector.load %arg3[%c0_6, %c0_7] : memref<64x16xf32, #tpu.memory_space<vmem>>, vector<64x16xf32>
    %cst_8 = arith.constant 0.000000e+00 : f32
    %14 = vector.broadcast %cst_8 : f32 to vector<16x16xf32>
    %15 = vector.extract_strided_slice %8 {offsets = [0, 0, 0], sizes = [2, 8, 16], strides = [1, 1, 1]} : vector<2x8x64xf32> to vector<2x8x16xf32>
    %16 = vector.extract_strided_slice %10 {offsets = [0, 0, 0], sizes = [2, 8, 16], strides = [1, 1, 1]} : vector<2x8x64xf32> to vector<2x8x16xf32>
    %17 = vector.extract_strided_slice %12 {offsets = [0, 0, 0], sizes = [2, 8, 16], strides = [1, 1, 1]} : vector<2x8x64xf32> to vector<2x8x16xf32>
    "tpu.trace_start"() <{level = 10 : i32, message = "bqd,bkd->bqk"}> : () -> ()
    %cst_9 = arith.constant dense<0.000000e+00> : vector<2x8x8xf32>
    %18 = tpu.matmul %15, %16, %cst_9 {dimension_numbers = #tpu.dot_dimension_numbers<[2], [2], [1], [1], [0, 0, 0, 1, 1, 1], [0], [0]>} : vector<2x8x16xf32>, vector<2x8x16xf32>, vector<2x8x8xf32> -> vector<2x8x8xf32>
    "tpu.trace_stop"() : () -> ()
    %cst_10 = arith.constant 2.500000e-01 : f32
    %19 = vector.broadcast %cst_10 : f32 to vector<2x8x8xf32>
    %20 = arith.mulf %18, %19 : vector<2x8x8xf32>
    %cst_11 = arith.constant dense<0xFF800000> : vector<2x8xf32>
    %21 = vector.multi_reduction <maximumf>, %20, %cst_11 [2] : vector<2x8x8xf32> to vector<2x8xf32>
    %22 = vector.shape_cast %21 : vector<2x8xf32> to vector<2x8x1xf32>
    %23 = vector.broadcast %22 : vector<2x8x1xf32> to vector<2x8x8xf32>
    %24 = arith.subf %20, %23 : vector<2x8x8xf32>
    %25 = math.exp %24 : vector<2x8x8xf32>
    %cst_12 = arith.constant dense<0.000000e+00> : vector<2x8xf32>
    %26 = vector.multi_reduction <add>, %25, %cst_12 [2] : vector<2x8x8xf32> to vector<2x8xf32>
    %27 = vector.shape_cast %26 : vector<2x8xf32> to vector<2x8x1xf32>
    %28 = tpu.reciprocal %27 {approx = true} : vector<2x8x1xf32> -> vector<2x8x1xf32>
    %29 = vector.broadcast %28 : vector<2x8x1xf32> to vector<2x8x8xf32>
    %30 = arith.mulf %25, %29 : vector<2x8x8xf32>
    "tpu.trace_start"() <{level = 10 : i32, message = "bqk,bkd->bqd"}> : () -> ()
    %cst_13 = arith.constant dense<0.000000e+00> : vector<2x8x16xf32>
    %31 = tpu.matmul %30, %17, %cst_13 {dimension_numbers = #tpu.dot_dimension_numbers<[2], [1], [1], [2], [0, 0, 0, 1, 1, 2], [0], [0]>} : vector<2x8x8xf32>, vector<2x8x16xf32>, vector<2x8x16xf32> -> vector<2x8x16xf32>
    "tpu.trace_stop"() : () -> ()
    %32 = vector.shape_cast %31 : vector<2x8x16xf32> to vector<16x16xf32>
    %33 = vector.extract_strided_slice %13 {offsets = [0, 0], sizes = [16, 16], strides = [1, 1]} : vector<64x16xf32> to vector<16x16xf32>
    %cst_14 = arith.constant dense<0.000000e+00> : vector<16x16xf32>
    %34 = tpu.matmul %32, %33, %cst_14 {dimension_numbers = #tpu.dot_dimension_numbers<[1], [0], [0], [1], [0, 0, 1, 1], [], []>} : vector<16x16xf32>, vector<16x16xf32>, vector<16x16xf32> -> vector<16x16xf32>
    %35 = arith.addf %14, %34 : vector<16x16xf32>
    %36 = vector.extract_strided_slice %8 {offsets = [0, 0, 16], sizes = [2, 8, 16], strides = [1, 1, 1]} : vector<2x8x64xf32> to vector<2x8x16xf32>
    %37 = vector.extract_strided_slice %10 {offsets = [0, 0, 16], sizes = [2, 8, 16], strides = [1, 1, 1]} : vector<2x8x64xf32> to vector<2x8x16xf32>
    %38 = vector.extract_strided_slice %12 {offsets = [0, 0, 16], sizes = [2, 8, 16], strides = [1, 1, 1]} : vector<2x8x64xf32> to vector<2x8x16xf32>
    "tpu.trace_start"() <{level = 10 : i32, message = "bqd,bkd->bqk"}> : () -> ()
    %cst_15 = arith.constant dense<0.000000e+00> : vector<2x8x8xf32>
    %39 = tpu.matmul %36, %37, %cst_15 {dimension_numbers = #tpu.dot_dimension_numbers<[2], [2], [1], [1], [0, 0, 0, 1, 1, 1], [0], [0]>} : vector<2x8x16xf32>, vector<2x8x16xf32>, vector<2x8x8xf32> -> vector<2x8x8xf32>
    "tpu.trace_stop"() : () -> ()
    %cst_16 = arith.constant 2.500000e-01 : f32
    %40 = vector.broadcast %cst_16 : f32 to vector<2x8x8xf32>
    %41 = arith.mulf %39, %40 : vector<2x8x8xf32>
    %cst_17 = arith.constant dense<0xFF800000> : vector<2x8xf32>
    %42 = vector.multi_reduction <maximumf>, %41, %cst_17 [2] : vector<2x8x8xf32> to vector<2x8xf32>
    %43 = vector.shape_cast %42 : vector<2x8xf32> to vector<2x8x1xf32>
    %44 = vector.broadcast %43 : vector<2x8x1xf32> to vector<2x8x8xf32>
    %45 = arith.subf %41, %44 : vector<2x8x8xf32>
    %46 = math.exp %45 : vector<2x8x8xf32>
    %cst_18 = arith.constant dense<0.000000e+00> : vector<2x8xf32>
    %47 = vector.multi_reduction <add>, %46, %cst_18 [2] : vector<2x8x8xf32> to vector<2x8xf32>
    %48 = vector.shape_cast %47 : vector<2x8xf32> to vector<2x8x1xf32>
    %49 = tpu.reciprocal %48 {approx = true} : vector<2x8x1xf32> -> vector<2x8x1xf32>
    %50 = vector.broadcast %49 : vector<2x8x1xf32> to vector<2x8x8xf32>
    %51 = arith.mulf %46, %50 : vector<2x8x8xf32>
    "tpu.trace_start"() <{level = 10 : i32, message = "bqk,bkd->bqd"}> : () -> ()
    %cst_19 = arith.constant dense<0.000000e+00> : vector<2x8x16xf32>
    %52 = tpu.matmul %51, %38, %cst_19 {dimension_numbers = #tpu.dot_dimension_numbers<[2], [1], [1], [2], [0, 0, 0, 1, 1, 2], [0], [0]>} : vector<2x8x8xf32>, vector<2x8x16xf32>, vector<2x8x16xf32> -> vector<2x8x16xf32>
    "tpu.trace_stop"() : () -> ()
    %53 = vector.shape_cast %52 : vector<2x8x16xf32> to vector<16x16xf32>
    %54 = vector.extract_strided_slice %13 {offsets = [16, 0], sizes = [16, 16], strides = [1, 1]} : vector<64x16xf32> to vector<16x16xf32>
    %cst_20 = arith.constant dense<0.000000e+00> : vector<16x16xf32>
    %55 = tpu.matmul %53, %54, %cst_20 {dimension_numbers = #tpu.dot_dimension_numbers<[1], [0], [0], [1], [0, 0, 1, 1], [], []>} : vector<16x16xf32>, vector<16x16xf32>, vector<16x16xf32> -> vector<16x16xf32>
    %56 = arith.addf %35, %55 : vector<16x16xf32>
    %57 = vector.extract_strided_slice %8 {offsets = [0, 0, 32], sizes = [2, 8, 16], strides = [1, 1, 1]} : vector<2x8x64xf32> to vector<2x8x16xf32>
    %58 = vector.extract_strided_slice %10 {offsets = [0, 0, 32], sizes = [2, 8, 16], strides = [1, 1, 1]} : vector<2x8x64xf32> to vector<2x8x16xf32>
    %59 = vector.extract_strided_slice %12 {offsets = [0, 0, 32], sizes = [2, 8, 16], strides = [1, 1, 1]} : vector<2x8x64xf32> to vector<2x8x16xf32>
    "tpu.trace_start"() <{level = 10 : i32, message = "bqd,bkd->bqk"}> : () -> ()
    %cst_21 = arith.constant dense<0.000000e+00> : vector<2x8x8xf32>
    %60 = tpu.matmul %57, %58, %cst_21 {dimension_numbers = #tpu.dot_dimension_numbers<[2], [2], [1], [1], [0, 0, 0, 1, 1, 1], [0], [0]>} : vector<2x8x16xf32>, vector<2x8x16xf32>, vector<2x8x8xf32> -> vector<2x8x8xf32>
    "tpu.trace_stop"() : () -> ()
    %cst_22 = arith.constant 2.500000e-01 : f32
    %61 = vector.broadcast %cst_22 : f32 to vector<2x8x8xf32>
    %62 = arith.mulf %60, %61 : vector<2x8x8xf32>
    %cst_23 = arith.constant dense<0xFF800000> : vector<2x8xf32>
    %63 = vector.multi_reduction <maximumf>, %62, %cst_23 [2] : vector<2x8x8xf32> to vector<2x8xf32>
    %64 = vector.shape_cast %63 : vector<2x8xf32> to vector<2x8x1xf32>
    %65 = vector.broadcast %64 : vector<2x8x1xf32> to vector<2x8x8xf32>
    %66 = arith.subf %62, %65 : vector<2x8x8xf32>
    %67 = math.exp %66 : vector<2x8x8xf32>
    %cst_24 = arith.constant dense<0.000000e+00> : vector<2x8xf32>
    %68 = vector.multi_reduction <add>, %67, %cst_24 [2] : vector<2x8x8xf32> to vector<2x8xf32>
    %69 = vector.shape_cast %68 : vector<2x8xf32> to vector<2x8x1xf32>
    %70 = tpu.reciprocal %69 {approx = true} : vector<2x8x1xf32> -> vector<2x8x1xf32>
    %71 = vector.broadcast %70 : vector<2x8x1xf32> to vector<2x8x8xf32>
    %72 = arith.mulf %67, %71 : vector<2x8x8xf32>
    "tpu.trace_start"() <{level = 10 : i32, message = "bqk,bkd->bqd"}> : () -> ()
    %cst_25 = arith.constant dense<0.000000e+00> : vector<2x8x16xf32>
    %73 = tpu.matmul %72, %59, %cst_25 {dimension_numbers = #tpu.dot_dimension_numbers<[2], [1], [1], [2], [0, 0, 0, 1, 1, 2], [0], [0]>} : vector<2x8x8xf32>, vector<2x8x16xf32>, vector<2x8x16xf32> -> vector<2x8x16xf32>
    "tpu.trace_stop"() : () -> ()
    %74 = vector.shape_cast %73 : vector<2x8x16xf32> to vector<16x16xf32>
    %75 = vector.extract_strided_slice %13 {offsets = [32, 0], sizes = [16, 16], strides = [1, 1]} : vector<64x16xf32> to vector<16x16xf32>
    %cst_26 = arith.constant dense<0.000000e+00> : vector<16x16xf32>
    %76 = tpu.matmul %74, %75, %cst_26 {dimension_numbers = #tpu.dot_dimension_numbers<[1], [0], [0], [1], [0, 0, 1, 1], [], []>} : vector<16x16xf32>, vector<16x16xf32>, vector<16x16xf32> -> vector<16x16xf32>
    %77 = arith.addf %56, %76 : vector<16x16xf32>
    %78 = vector.extract_strided_slice %8 {offsets = [0, 0, 48], sizes = [2, 8, 16], strides = [1, 1, 1]} : vector<2x8x64xf32> to vector<2x8x16xf32>
    %79 = vector.extract_strided_slice %10 {offsets = [0, 0, 48], sizes = [2, 8, 16], strides = [1, 1, 1]} : vector<2x8x64xf32> to vector<2x8x16xf32>
    %80 = vector.extract_strided_slice %12 {offsets = [0, 0, 48], sizes = [2, 8, 16], strides = [1, 1, 1]} : vector<2x8x64xf32> to vector<2x8x16xf32>
    "tpu.trace_start"() <{level = 10 : i32, message = "bqd,bkd->bqk"}> : () -> ()
    %cst_27 = arith.constant dense<0.000000e+00> : vector<2x8x8xf32>
    %81 = tpu.matmul %78, %79, %cst_27 {dimension_numbers = #tpu.dot_dimension_numbers<[2], [2], [1], [1], [0, 0, 0, 1, 1, 1], [0], [0]>} : vector<2x8x16xf32>, vector<2x8x16xf32>, vector<2x8x8xf32> -> vector<2x8x8xf32>
    "tpu.trace_stop"() : () -> ()
    %cst_28 = arith.constant 2.500000e-01 : f32
    %82 = vector.broadcast %cst_28 : f32 to vector<2x8x8xf32>
    %83 = arith.mulf %81, %82 : vector<2x8x8xf32>
    %cst_29 = arith.constant dense<0xFF800000> : vector<2x8xf32>
    %84 = vector.multi_reduction <maximumf>, %83, %cst_29 [2] : vector<2x8x8xf32> to vector<2x8xf32>
    %85 = vector.shape_cast %84 : vector<2x8xf32> to vector<2x8x1xf32>
    %86 = vector.broadcast %85 : vector<2x8x1xf32> to vector<2x8x8xf32>
    %87 = arith.subf %83, %86 : vector<2x8x8xf32>
    %88 = math.exp %87 : vector<2x8x8xf32>
    %cst_30 = arith.constant dense<0.000000e+00> : vector<2x8xf32>
    %89 = vector.multi_reduction <add>, %88, %cst_30 [2] : vector<2x8x8xf32> to vector<2x8xf32>
    %90 = vector.shape_cast %89 : vector<2x8xf32> to vector<2x8x1xf32>
    %91 = tpu.reciprocal %90 {approx = true} : vector<2x8x1xf32> -> vector<2x8x1xf32>
    %92 = vector.broadcast %91 : vector<2x8x1xf32> to vector<2x8x8xf32>
    %93 = arith.mulf %88, %92 : vector<2x8x8xf32>
    "tpu.trace_start"() <{level = 10 : i32, message = "bqk,bkd->bqd"}> : () -> ()
    %cst_31 = arith.constant dense<0.000000e+00> : vector<2x8x16xf32>
    %94 = tpu.matmul %93, %80, %cst_31 {dimension_numbers = #tpu.dot_dimension_numbers<[2], [1], [1], [2], [0, 0, 0, 1, 1, 2], [0], [0]>} : vector<2x8x8xf32>, vector<2x8x16xf32>, vector<2x8x16xf32> -> vector<2x8x16xf32>
    "tpu.trace_stop"() : () -> ()
    %95 = vector.shape_cast %94 : vector<2x8x16xf32> to vector<16x16xf32>
    %96 = vector.extract_strided_slice %13 {offsets = [48, 0], sizes = [16, 16], strides = [1, 1]} : vector<64x16xf32> to vector<16x16xf32>
    %cst_32 = arith.constant dense<0.000000e+00> : vector<16x16xf32>
    %97 = tpu.matmul %95, %96, %cst_32 {dimension_numbers = #tpu.dot_dimension_numbers<[1], [0], [0], [1], [0, 0, 1, 1], [], []>} : vector<16x16xf32>, vector<16x16xf32>, vector<16x16xf32> -> vector<16x16xf32>
    %98 = arith.addf %77, %97 : vector<16x16xf32>
    %c0_33 = arith.constant 0 : index
    %c0_34 = arith.constant 0 : index
    %99 = vector.load %arg4[%c0_33, %c0_34] : memref<1x16xf32, #tpu.memory_space<vmem>>, vector<1x16xf32>
    %100 = vector.broadcast %99 : vector<1x16xf32> to vector<16x16xf32>
    %101 = arith.addf %98, %100 : vector<16x16xf32>
    %102 = vector.shape_cast %101 : vector<16x16xf32> to vector<2x8x16xf32>
    %c0_35 = arith.constant 0 : index
    %c0_36 = arith.constant 0 : index
    %c0_37 = arith.constant 0 : index
    %103 = vector.load %arg5[%c0_35, %c0_36, %c0_37] : memref<2x8x16xf32, #tpu.memory_space<vmem>>, vector<2x8x16xf32>
    tpu.vector_store %arg5[%c0_35, %c0_36, %c0_37], %102 {strides = array<i32>} : memref<2x8x16xf32, #tpu.memory_space<vmem>>, vector<2x8x16xf32>,
    return
  }
}

</mosaic_0001>

<llo_original>
// kernel: multi_attention_heads.1
$region0: #{multi_attention_heads.1}
  #allocation0 [shape = 'u32[]', space=smem, size = 0x4, offset = 0x4, fixed_abs, tag = 'smem constant byte address 0x4 - core index']
  #allocation1 [shape = 'u32[72,128]{1,0:T(1,128)}', space=vmem, size = 0x9000, scoped, tag = 'internal scratch']
  %s0 = inlined_call_operand.vmem [shape: f32[2,8,32], index: 0, kind: input, shape index: {}]
  %s1 = inlined_call_operand.vmem [shape: f32[32,192], index: 1, kind: input, shape index: {}]
  %s2 = inlined_call_operand.vmem [shape: f32[1,192], index: 2, kind: input, shape index: {}]
  %s3 = inlined_call_operand.vmem [shape: f32[64,16], index: 3, kind: input, shape index: {}]
  %s4 = inlined_call_operand.vmem [shape: f32[1,16], index: 4, kind: input, shape index: {}]
  %s5 = inlined_call_operand.hbm [shape: f32[2,8,16], index: 5, kind: output, shape index: {}]
  %s6 = sld [smem:[#allocation0]]
  $region30: #{multi_attention_heads.1} parent=0
    _
  %s8 = ssub.s32 1, %s6
  %s9 = scalar_select 0, %s8, %s6
  $region1: #{multi_attention_heads.1} parent=0
    #allocation2 [shape = 'u8[8192]{0}', space=vmem, size = 0x2000, scoped, tag = 'output window, operand 0, single buffered']
    #allocation3 [shape = 's32[1]{0}', space=sflag, size = 0x4, scoped, tag = 'scoped memory for multi_attention_heads.1']
    %10 = vsyncpa [#allocation3], 0
    // Predicated region
    $region2: #{multi_attention_heads.1} parent=1 // pred_check
      _
    $region3: #{multi_attention_heads.1} parent=1 // pred_check_branch
      %12 = sbr.rel (0) target = $region5
    $region4: #{multi_attention_heads.1} parent=1 // pred_region
      _
    $region5: #{multi_attention_heads.1} parent=1 // pred_fallthru
      _
    // Predicated region
    $region6: #{multi_attention_heads.1} parent=1 // pred_check
      _
    $region7: #{multi_attention_heads.1} parent=1 // pred_check_branch
      %14 = sbr.rel (0) target = $region9
    $region8: #{multi_attention_heads.1} parent=1 // pred_region
      _
    $region9: #{multi_attention_heads.1} parent=1 // pred_fallthru
      _
    // Predicated region
    $region10: #{multi_attention_heads.1} parent=1 // pred_check
      _
    $region11: #{multi_attention_heads.1} parent=1 // pred_check_branch
      %16 = sbr.rel (0) target = $region13
    $region12: #{multi_attention_heads.1} parent=1 // pred_region
      _
    $region13: #{multi_attention_heads.1} parent=1 // pred_fallthru
      _
    // Predicated region
    $region14: #{multi_attention_heads.1} parent=1 // pred_check
      _
    $region15: #{multi_attention_heads.1} parent=1 // pred_check_branch
      %18 = sbr.rel (0) target = $region17
    $region16: #{multi_attention_heads.1} parent=1 // pred_region
      _
    $region17: #{multi_attention_heads.1} parent=1 // pred_fallthru
      _
    // Predicated region
    $region18: #{multi_attention_heads.1} parent=1 // pred_check
      _
    $region19: #{multi_attention_heads.1} parent=1 // pred_check_branch
      %20 = sbr.rel (0) target = $region21
    $region20: #{multi_attention_heads.1} parent=1 // pred_region
      _
    $region21: #{multi_attention_heads.1} parent=1 // pred_fallthru
      _
    %v21 = vld [vmem:[%s0] sm:$0xff]
    %v22 = vld [vmem:[%s0 + $0x8] sm:$0xff]
    %v23 = vld [vmem:[%s1] sm:$0xff]
    %v24 = vld [vmem:[%s1 + $0x8] sm:$0xff]
    %v25 = vld [vmem:[%s1 + $0x10] sm:$0xff]
    %v26 = vld [vmem:[%s1 + $0x18] sm:$0xff]
    %v27 = vld [vmem:[%s1 + $0x20] sm:$0xff]
    %v28 = vld [vmem:[%s1 + $0x28] sm:$0xff]
    %v29 = vld [vmem:[%s1 + $0x30] sm:$0xff]
    %v30 = vld [vmem:[%s1 + $0x38] sm:$0xff]
    %v31 = vld [vmem:[%s2] sm:$0x3]
    %v33 = vperm.slane %v31, 0
    %v34 = vperm.slane %v31, 1
    %vm37 = vcmask 261120
    %v39 = vsel %vm37, %v21, 0
    %v42 = vsel %vm37, %v22, 0
    %44 = vmatpush.msra.mxu0 0.0
    %45 = vmatpush.msra.mxu0 0.0
    %46 = vmatpush.msra.mxu0 0.0
    %47 = vmatpush.msra.mxu0 0.0
    %48 = vmatpush.msra.mxu0 0.0
    %49 = vmatpush.msra.mxu0 0.0
    %50 = vmatpush.msra.mxu0 0.0
    %51 = vmatpush.msra.mxu0 0.0
    %52 = vmatpush.msra.mxu0 0.0
    %53 = vmatpush.msra.mxu0 0.0
    %54 = vmatpush.msra.mxu0 0.0
    %55 = vmatpush.msra.mxu0 0.0
    %56 = vmatpush.msra.mxu0 %v29
    %57 = vmatpush.msra.mxu0 %v27
    %58 = vmatpush.msra.mxu0 %v25
    %59 = vmatpush.msra.mxu0 %v23
    %60 = vmatmul.f32.gmra.mxu0 %v39
    %v61 = vpop.f32.mrf.mxu0
    %v62 = vadd.f32 %v33, %v61
    %63 = vmatmul.f32.gmra.mxu0 %v42
    %v64 = vpop.f32.mrf.mxu0
    %v65 = vadd.f32 %v33, %v64
    %66 = vdwg.mxu0
    %67 = vmatpush.msra.mxu0 0.0
    %68 = vmatpush.msra.mxu0 0.0
    %69 = vmatpush.msra.mxu0 0.0
    %70 = vmatpush.msra.mxu0 0.0
    %71 = vmatpush.msra.mxu0 0.0
    %72 = vmatpush.msra.mxu0 0.0
    %73 = vmatpush.msra.mxu0 0.0
    %74 = vmatpush.msra.mxu0 0.0
    %75 = vmatpush.msra.mxu0 0.0
    %76 = vmatpush.msra.mxu0 0.0
    %77 = vmatpush.msra.mxu0 0.0
    %78 = vmatpush.msra.mxu0 0.0
    %79 = vmatpush.msra.mxu0 %v30
    %80 = vmatpush.msra.mxu0 %v28
    %81 = vmatpush.msra.mxu0 %v26
    %82 = vmatpush.msra.mxu0 %v24
    %83 = vmatmul.f32.gmra.mxu0 %v39
    %v84 = vpop.f32.mrf.mxu0
    %v85 = vadd.f32 %v34, %v84
    %86 = vmatmul.f32.gmra.mxu0 %v42
    %v87 = vpop.f32.mrf.mxu0
    %v88 = vadd.f32 %v34, %v87
    %89 = vdwg.mxu0
    %v90 = vld [vmem:[%s3] sm:$0xff]
    %v91 = vld [vmem:[%s3 + $0x8] sm:$0xff]
    %v92 = vld [vmem:[%s3 + $0x10] sm:$0xff]
    %v93 = vld [vmem:[%s3 + $0x18] sm:$0xff]
    %v94 = vld [vmem:[%s3 + $0x20] sm:$0xff]
    %v95 = vld [vmem:[%s3 + $0x28] sm:$0xff]
    %v96 = vld [vmem:[%s3 + $0x30] sm:$0xff]
    %v97 = vld [vmem:[%s3 + $0x38] sm:$0xff]
    %99 = vrot.lane.b32.xlu0 %v62, 64
    %v100 = vpop.permute.xlu0 %99
    %vm101 = vcmask 130048
    %v102 = vsel %vm101, %v62, 0
    %v104 = vsel %vm101, %v100, 0
    %106 = vmatpush.xpose.msra.mxu0 0.0
    %107 = vmatpush.xpose.msra.mxu0 0.0
    %108 = vmatpush.xpose.msra.mxu0 0.0
    %109 = vmatpush.xpose.msra.mxu0 0.0
    %110 = vmatpush.xpose.msra.mxu0 0.0
    %111 = vmatpush.xpose.msra.mxu0 0.0
    %112 = vmatpush.xpose.msra.mxu0 0.0
    %113 = vmatpush.xpose.msra.mxu0 0.0
    %114 = vmatpush.xpose.msra.mxu0 0.0
    %115 = vmatpush.xpose.msra.mxu0 0.0
    %116 = vmatpush.xpose.msra.mxu0 0.0
    %117 = vmatpush.xpose.msra.mxu0 0.0
    %118 = vmatpush.xpose.msra.mxu0 0.0
    %119 = vmatpush.xpose.msra.mxu0 0.0
    %120 = vmatpush.xpose.msra.mxu0 0.0
    %121 = vmatpush.xpose.msra.mxu0 %v104
    %122 = vmatmul.f32.gmra.mxu0 %v102
    %v123 = vpop.f32.mrf.mxu0
    %v124 = vadd.f32 0.0, %v123
    %125 = vdwg.mxu0
    %127 = vrot.lane.b32.xlu0 %v65, 64
    %v128 = vpop.permute.xlu0 %127
    %v129 = vsel %vm101, %v65, 0
    %v131 = vsel %vm101, %v128, 0
    %133 = vmatpush.xpose.msra.mxu0 0.0
    %134 = vmatpush.xpose.msra.mxu0 0.0
    %135 = vmatpush.xpose.msra.mxu0 0.0
    %136 = vmatpush.xpose.msra.mxu0 0.0
    %137 = vmatpush.xpose.msra.mxu0 0.0
    %138 = vmatpush.xpose.msra.mxu0 0.0
    %139 = vmatpush.xpose.msra.mxu0 0.0
    %140 = vmatpush.xpose.msra.mxu0 0.0
    %141 = vmatpush.xpose.msra.mxu0 0.0
    %142 = vmatpush.xpose.msra.mxu0 0.0
    %143 = vmatpush.xpose.msra.mxu0 0.0
    %144 = vmatpush.xpose.msra.mxu0 0.0
    %145 = vmatpush.xpose.msra.mxu0 0.0
    %146 = vmatpush.xpose.msra.mxu0 0.0
    %147 = vmatpush.xpose.msra.mxu0 0.0
    %148 = vmatpush.xpose.msra.mxu0 %v131
    %149 = vmatmul.f32.gmra.mxu0 %v129
    %v150 = vpop.f32.mrf.mxu0
    %v151 = vadd.f32 0.0, %v150
    %152 = vdwg.mxu0
    %v153 = vmul.f32 %v124, 0.25
    %v154 = vmul.f32 %v151, 0.25
    %vm155 = vcmask 64512
    %v156 = vsel %vm155, %v153, -inf
    %157 = vmax.xlane.f32.xlu0 %v156
    %v158 = vpop.xlane.xlu0 %157
    %v159 = vsel %vm155, %v154, -inf
    %160 = vmax.xlane.f32.xlu0 %v159
    %v161 = vpop.xlane.xlu0 %160
    %v162 = vsub.f32 %v153, %v158
    %v163 = vsub.f32 %v154, %v161
    %v164 = vmul.f32 %v162, 1.442695
    %v165 = vpow.pop %v164
    %v166 = vmul.f32 %v163, 1.442695
    %v167 = vpow.pop %v166
    %v168 = vsel %vm155, %v165, 0.0
    %169 = vadd.xlane.f32.xlu0 %v168
    %v170 = vpop.xlane.xlu0 %169
    %v171 = vsel %vm155, %v167, 0.0
    %172 = vadd.xlane.f32.xlu0 %v171
    %v173 = vpop.xlane.xlu0 %172
    %v174 = vrcp.pop %v170
    %v175 = vrcp.pop %v173
    %v176 = vmul.f32 %v165, %v174
    %v177 = vmul.f32 %v167, %v175
    %v179 = vsel %vm155, %v176, 0
    %181 = vmatpush.msra.mxu0 0.0
    %182 = vmatpush.msra.mxu0 0.0
    %183 = vmatpush.msra.mxu0 0.0
    %184 = vmatpush.msra.mxu0 0.0
    %185 = vmatpush.msra.mxu0 0.0
    %186 = vmatpush.msra.mxu0 0.0
    %187 = vmatpush.msra.mxu0 0.0
    %188 = vmatpush.msra.mxu0 0.0
    %189 = vmatpush.msra.mxu0 0.0
    %190 = vmatpush.msra.mxu0 0.0
    %191 = vmatpush.msra.mxu0 0.0
    %192 = vmatpush.msra.mxu0 0.0
    %193 = vmatpush.msra.mxu0 0.0
    %194 = vmatpush.msra.mxu0 0.0
    %195 = vmatpush.msra.mxu0 0.0
    %196 = vmatpush.msra.mxu0 %v85
    %197 = vmatmul.f32.gmra.mxu0 %v179
    %v198 = vpop.f32.mrf.mxu0
    %v199 = vadd.f32 0.0, %v198
    %200 = vdwg.mxu0
    %v202 = vsel %vm155, %v177, 0
    %204 = vmatpush.msra.mxu0 0.0
    %205 = vmatpush.msra.mxu0 0.0
    %206 = vmatpush.msra.mxu0 0.0
    %207 = vmatpush.msra.mxu0 0.0
    %208 = vmatpush.msra.mxu0 0.0
    %209 = vmatpush.msra.mxu0 0.0
    %210 = vmatpush.msra.mxu0 0.0
    %211 = vmatpush.msra.mxu0 0.0
    %212 = vmatpush.msra.mxu0 0.0
    %213 = vmatpush.msra.mxu0 0.0
    %214 = vmatpush.msra.mxu0 0.0
    %215 = vmatpush.msra.mxu0 0.0
    %216 = vmatpush.msra.mxu0 0.0
    %217 = vmatpush.msra.mxu0 0.0
    %218 = vmatpush.msra.mxu0 0.0
    %219 = vmatpush.msra.mxu0 %v88
    %220 = vmatmul.f32.gmra.mxu0 %v202
    %v221 = vpop.f32.mrf.mxu0
    %v222 = vadd.f32 0.0, %v221
    %223 = vdwg.mxu0
    %224 = vrot.lane.b32.xlu0 %v62, 112
    %v225 = vpop.permute.xlu0 %224
    %226 = vrot.lane.b32.xlu0 %v62, 48
    %v227 = vpop.permute.xlu0 %226
    %v228 = vsel %vm101, %v225, 0
    %v230 = vsel %vm101, %v227, 0
    %232 = vmatpush.xpose.msra.mxu0 0.0
    %233 = vmatpush.xpose.msra.mxu0 0.0
    %234 = vmatpush.xpose.msra.mxu0 0.0
    %235 = vmatpush.xpose.msra.mxu0 0.0
    %236 = vmatpush.xpose.msra.mxu0 0.0
    %237 = vmatpush.xpose.msra.mxu0 0.0
    %238 = vmatpush.xpose.msra.mxu0 0.0
    %239 = vmatpush.xpose.msra.mxu0 0.0
    %240 = vmatpush.xpose.msra.mxu0 0.0
    %241 = vmatpush.xpose.msra.mxu0 0.0
    %242 = vmatpush.xpose.msra.mxu0 0.0
    %243 = vmatpush.xpose.msra.mxu0 0.0
    %244 = vmatpush.xpose.msra.mxu0 0.0
    %245 = vmatpush.xpose.msra.mxu0 0.0
    %246 = vmatpush.xpose.msra.mxu0 0.0
    %247 = vmatpush.xpose.msra.mxu0 %v230
    %248 = vmatmul.f32.gmra.mxu0 %v228
    %v249 = vpop.f32.mrf.mxu0
    %v250 = vadd.f32 0.0, %v249
    %251 = vdwg.mxu0
    %252 = vrot.lane.b32.xlu0 %v65, 112
    %v253 = vpop.permute.xlu0 %252
    %254 = vrot.lane.b32.xlu0 %v65, 48
    %v255 = vpop.permute.xlu0 %254
    %v256 = vsel %vm101, %v253, 0
    %v258 = vsel %vm101, %v255, 0
    %260 = vmatpush.xpose.msra.mxu0 0.0
    %261 = vmatpush.xpose.msra.mxu0 0.0
    %262 = vmatpush.xpose.msra.mxu0 0.0
    %263 = vmatpush.xpose.msra.mxu0 0.0
    %264 = vmatpush.xpose.msra.mxu0 0.0
    %265 = vmatpush.xpose.msra.mxu0 0.0
    %266 = vmatpush.xpose.msra.mxu0 0.0
    %267 = vmatpush.xpose.msra.mxu0 0.0
    %268 = vmatpush.xpose.msra.mxu0 0.0
    %269 = vmatpush.xpose.msra.mxu0 0.0
    %270 = vmatpush.xpose.msra.mxu0 0.0
    %271 = vmatpush.xpose.msra.mxu0 0.0
    %272 = vmatpush.xpose.msra.mxu0 0.0
    %273 = vmatpush.xpose.msra.mxu0 0.0
    %274 = vmatpush.xpose.msra.mxu0 0.0
    %275 = vmatpush.xpose.msra.mxu0 %v258
    %276 = vmatmul.f32.gmra.mxu0 %v256
    %v277 = vpop.f32.mrf.mxu0
    %v278 = vadd.f32 0.0, %v277
    %279 = vdwg.mxu0
    %v280 = vmul.f32 %v250, 0.25
    %v281 = vmul.f32 %v278, 0.25
    %v282 = vsel %vm155, %v280, -inf
    %283 = vmax.xlane.f32.xlu0 %v282
    %v284 = vpop.xlane.xlu0 %283
    %v285 = vsel %vm155, %v281, -inf
    %286 = vmax.xlane.f32.xlu0 %v285
    %v287 = vpop.xlane.xlu0 %286
    %v288 = vsub.f32 %v280, %v284
    %v289 = vsub.f32 %v281, %v287
    %v290 = vmul.f32 %v288, 1.442695
    %v291 = vpow.pop %v290
    %v292 = vmul.f32 %v289, 1.442695
    %v293 = vpow.pop %v292
    %v294 = vsel %vm155, %v291, 0.0
    %295 = vadd.xlane.f32.xlu0 %v294
    %v296 = vpop.xlane.xlu0 %295
    %v297 = vsel %vm155, %v293, 0.0
    %298 = vadd.xlane.f32.xlu0 %v297
    %v299 = vpop.xlane.xlu0 %298
    %v300 = vrcp.pop %v296
    %v301 = vrcp.pop %v299
    %v302 = vmul.f32 %v291, %v300
    %v303 = vmul.f32 %v293, %v301
    %305 = vrot.lane.b32.xlu0 %v85, 112
    %v306 = vpop.permute.xlu0 %305
    %v309 = vsel %vm155, %v302, 0
    %311 = vmatpush.msra.mxu0 0.0
    %312 = vmatpush.msra.mxu0 0.0
    %313 = vmatpush.msra.mxu0 0.0
    %314 = vmatpush.msra.mxu0 0.0
    %315 = vmatpush.msra.mxu0 0.0
    %316 = vmatpush.msra.mxu0 0.0
    %317 = vmatpush.msra.mxu0 0.0
    %318 = vmatpush.msra.mxu0 0.0
    %319 = vmatpush.msra.mxu0 0.0
    %320 = vmatpush.msra.mxu0 0.0
    %321 = vmatpush.msra.mxu0 0.0
    %322 = vmatpush.msra.mxu0 0.0
    %323 = vmatpush.msra.mxu0 0.0
    %324 = vmatpush.msra.mxu0 0.0
    %325 = vmatpush.msra.mxu0 0.0
    %326 = vmatpush.msra.mxu0 %v306
    %327 = vmatmul.f32.gmra.mxu0 %v309
    %v328 = vpop.f32.mrf.mxu0
    %v329 = vadd.f32 0.0, %v328
    %330 = vdwg.mxu0
    %332 = vrot.lane.b32.xlu0 %v88, 112
    %v333 = vpop.permute.xlu0 %332
    %v336 = vsel %vm155, %v303, 0
    %338 = vmatpush.msra.mxu0 0.0
    %339 = vmatpush.msra.mxu0 0.0
    %340 = vmatpush.msra.mxu0 0.0
    %341 = vmatpush.msra.mxu0 0.0
    %342 = vmatpush.msra.mxu0 0.0
    %343 = vmatpush.msra.mxu0 0.0
    %344 = vmatpush.msra.mxu0 0.0
    %345 = vmatpush.msra.mxu0 0.0
    %346 = vmatpush.msra.mxu0 0.0
    %347 = vmatpush.msra.mxu0 0.0
    %348 = vmatpush.msra.mxu0 0.0
    %349 = vmatpush.msra.mxu0 0.0
    %350 = vmatpush.msra.mxu0 0.0
    %351 = vmatpush.msra.mxu0 0.0
    %352 = vmatpush.msra.mxu0 0.0
    %353 = vmatpush.msra.mxu0 %v333
    %354 = vmatmul.f32.gmra.mxu0 %v336
    %v355 = vpop.f32.mrf.mxu0
    %v356 = vadd.f32 0.0, %v355
    %357 = vdwg.mxu0
    %v359 = vsel %vm101, %v329, 0
    %v362 = vsel %vm101, %v356, 0
    %364 = vmatpush.msra.mxu0 0.0
    %365 = vmatpush.msra.mxu0 0.0
    %366 = vmatpush.msra.mxu0 0.0
    %367 = vmatpush.msra.mxu0 0.0
    %368 = vmatpush.msra.mxu0 0.0
    %369 = vmatpush.msra.mxu0 0.0
    %370 = vmatpush.msra.mxu0 0.0
    %371 = vmatpush.msra.mxu0 0.0
    %372 = vmatpush.msra.mxu0 0.0
    %373 = vmatpush.msra.mxu0 0.0
    %374 = vmatpush.msra.mxu0 0.0
    %375 = vmatpush.msra.mxu0 0.0
    %376 = vmatpush.msra.mxu0 0.0
    %377 = vmatpush.msra.mxu0 0.0
    %378 = vmatpush.msra.mxu0 %v93
    %379 = vmatpush.msra.mxu0 %v92
    %380 = vmatmul.f32.gmra.mxu0 %v359
    %v381 = vpop.f32.mrf.mxu0
    %v382 = vadd.f32 0.0, %v381
    %383 = vmatmul.f32.gmra.mxu0 %v362
    %v384 = vpop.f32.mrf.mxu0
    %v385 = vadd.f32 0.0, %v384
    %386 = vdwg.mxu0
    %v388 = vsel %vm101, %v199, 0
    %v391 = vsel %vm101, %v222, 0
    %393 = vmatpush.msra.mxu0 0.0
    %394 = vmatpush.msra.mxu0 0.0
    %395 = vmatpush.msra.mxu0 0.0
    %396 = vmatpush.msra.mxu0 0.0
    %397 = vmatpush.msra.mxu0 0.0
    %398 = vmatpush.msra.mxu0 0.0
    %399 = vmatpush.msra.mxu0 0.0
    %400 = vmatpush.msra.mxu0 0.0
    %401 = vmatpush.msra.mxu0 0.0
    %402 = vmatpush.msra.mxu0 0.0
    %403 = vmatpush.msra.mxu0 0.0
    %404 = vmatpush.msra.mxu0 0.0
    %405 = vmatpush.msra.mxu0 0.0
    %406 = vmatpush.msra.mxu0 0.0
    %407 = vmatpush.msra.mxu0 %v91
    %408 = vmatpush.msra.mxu0 %v90
    %409 = vmatmul.f32.gmra.mxu0 %v388
    %v410 = vpop.f32.mrf.mxu0
    %v411 = vadd.f32 %v382, %v410
    %412 = vmatmul.f32.gmra.mxu0 %v391
    %v413 = vpop.f32.mrf.mxu0
    %v414 = vadd.f32 %v385, %v413
    %415 = vdwg.mxu0
    %416 = vrot.lane.b32.xlu0 %v62, 96
    %v417 = vpop.permute.xlu0 %416
    %418 = vrot.lane.b32.xlu0 %v62, 32
    %v419 = vpop.permute.xlu0 %418
    %v420 = vsel %vm101, %v417, 0
    %v422 = vsel %vm101, %v419, 0
    %424 = vmatpush.xpose.msra.mxu0 0.0
    %425 = vmatpush.xpose.msra.mxu0 0.0
    %426 = vmatpush.xpose.msra.mxu0 0.0
    %427 = vmatpush.xpose.msra.mxu0 0.0
    %428 = vmatpush.xpose.msra.mxu0 0.0
    %429 = vmatpush.xpose.msra.mxu0 0.0
    %430 = vmatpush.xpose.msra.mxu0 0.0
    %431 = vmatpush.xpose.msra.mxu0 0.0
    %432 = vmatpush.xpose.msra.mxu0 0.0
    %433 = vmatpush.xpose.msra.mxu0 0.0
    %434 = vmatpush.xpose.msra.mxu0 0.0
    %435 = vmatpush.xpose.msra.mxu0 0.0
    %436 = vmatpush.xpose.msra.mxu0 0.0
    %437 = vmatpush.xpose.msra.mxu0 0.0
    %438 = vmatpush.xpose.msra.mxu0 0.0
    %439 = vmatpush.xpose.msra.mxu0 %v422
    %440 = vmatmul.f32.gmra.mxu0 %v420
    %v441 = vpop.f32.mrf.mxu0
    %v442 = vadd.f32 0.0, %v441
    %443 = vdwg.mxu0
    %444 = vrot.lane.b32.xlu0 %v65, 96
    %v445 = vpop.permute.xlu0 %444
    %446 = vrot.lane.b32.xlu0 %v65, 32
    %v447 = vpop.permute.xlu0 %446
    %v448 = vsel %vm101, %v445, 0
    %v450 = vsel %vm101, %v447, 0
    %452 = vmatpush.xpose.msra.mxu0 0.0
    %453 = vmatpush.xpose.msra.mxu0 0.0
    %454 = vmatpush.xpose.msra.mxu0 0.0
    %455 = vmatpush.xpose.msra.mxu0 0.0
    %456 = vmatpush.xpose.msra.mxu0 0.0
    %457 = vmatpush.xpose.msra.mxu0 0.0
    %458 = vmatpush.xpose.msra.mxu0 0.0
    %459 = vmatpush.xpose.msra.mxu0 0.0
    %460 = vmatpush.xpose.msra.mxu0 0.0
    %461 = vmatpush.xpose.msra.mxu0 0.0
    %462 = vmatpush.xpose.msra.mxu0 0.0
    %463 = vmatpush.xpose.msra.mxu0 0.0
    %464 = vmatpush.xpose.msra.mxu0 0.0
    %465 = vmatpush.xpose.msra.mxu0 0.0
    %466 = vmatpush.xpose.msra.mxu0 0.0
    %467 = vmatpush.xpose.msra.mxu0 %v450
    %468 = vmatmul.f32.gmra.mxu0 %v448
    %v469 = vpop.f32.mrf.mxu0
    %v470 = vadd.f32 0.0, %v469
    %471 = vdwg.mxu0
    %v472 = vmul.f32 %v442, 0.25
    %v473 = vmul.f32 %v470, 0.25
    %v474 = vsel %vm155, %v472, -inf
    %475 = vmax.xlane.f32.xlu0 %v474
    %v476 = vpop.xlane.xlu0 %475
    %v477 = vsel %vm155, %v473, -inf
    %478 = vmax.xlane.f32.xlu0 %v477
    %v479 = vpop.xlane.xlu0 %478
    %v480 = vsub.f32 %v472, %v476
    %v481 = vsub.f32 %v473, %v479
    %v482 = vmul.f32 %v480, 1.442695
    %v483 = vpow.pop %v482
    %v484 = vmul.f32 %v481, 1.442695
    %v485 = vpow.pop %v484
    %v486 = vsel %vm155, %v483, 0.0
    %487 = vadd.xlane.f32.xlu0 %v486
    %v488 = vpop.xlane.xlu0 %487
    %v489 = vsel %vm155, %v485, 0.0
    %490 = vadd.xlane.f32.xlu0 %v489
    %v491 = vpop.xlane.xlu0 %490
    %v492 = vrcp.pop %v488
    %v493 = vrcp.pop %v491
    %v494 = vmul.f32 %v483, %v492
    %v495 = vmul.f32 %v485, %v493
    %496 = vrot.lane.b32.xlu0 %v85, 96
    %v497 = vpop.permute.xlu0 %496
    %v500 = vsel %vm155, %v494, 0
    %502 = vmatpush.msra.mxu0 0.0
    %503 = vmatpush.msra.mxu0 0.0
    %504 = vmatpush.msra.mxu0 0.0
    %505 = vmatpush.msra.mxu0 0.0
    %506 = vmatpush.msra.mxu0 0.0
    %507 = vmatpush.msra.mxu0 0.0
    %508 = vmatpush.msra.mxu0 0.0
    %509 = vmatpush.msra.mxu0 0.0
    %510 = vmatpush.msra.mxu0 0.0
    %511 = vmatpush.msra.mxu0 0.0
    %512 = vmatpush.msra.mxu0 0.0
    %513 = vmatpush.msra.mxu0 0.0
    %514 = vmatpush.msra.mxu0 0.0
    %515 = vmatpush.msra.mxu0 0.0
    %516 = vmatpush.msra.mxu0 0.0
    %517 = vmatpush.msra.mxu0 %v497
    %518 = vmatmul.f32.gmra.mxu0 %v500
    %v519 = vpop.f32.mrf.mxu0
    %v520 = vadd.f32 0.0, %v519
    %521 = vdwg.mxu0
    %522 = vrot.lane.b32.xlu0 %v88, 96
    %v523 = vpop.permute.xlu0 %522
    %v526 = vsel %vm155, %v495, 0
    %528 = vmatpush.msra.mxu0 0.0
    %529 = vmatpush.msra.mxu0 0.0
    %530 = vmatpush.msra.mxu0 0.0
    %531 = vmatpush.msra.mxu0 0.0
    %532 = vmatpush.msra.mxu0 0.0
    %533 = vmatpush.msra.mxu0 0.0
    %534 = vmatpush.msra.mxu0 0.0
    %535 = vmatpush.msra.mxu0 0.0
    %536 = vmatpush.msra.mxu0 0.0
    %537 = vmatpush.msra.mxu0 0.0
    %538 = vmatpush.msra.mxu0 0.0
    %539 = vmatpush.msra.mxu0 0.0
    %540 = vmatpush.msra.mxu0 0.0
    %541 = vmatpush.msra.mxu0 0.0
    %542 = vmatpush.msra.mxu0 0.0
    %543 = vmatpush.msra.mxu0 %v523
    %544 = vmatmul.f32.gmra.mxu0 %v526
    %v545 = vpop.f32.mrf.mxu0
    %v546 = vadd.f32 0.0, %v545
    %547 = vdwg.mxu0
    %v549 = vsel %vm101, %v520, 0
    %v552 = vsel %vm101, %v546, 0
    %554 = vmatpush.msra.mxu0 0.0
    %555 = vmatpush.msra.mxu0 0.0
    %556 = vmatpush.msra.mxu0 0.0
    %557 = vmatpush.msra.mxu0 0.0
    %558 = vmatpush.msra.mxu0 0.0
    %559 = vmatpush.msra.mxu0 0.0
    %560 = vmatpush.msra.mxu0 0.0
    %561 = vmatpush.msra.mxu0 0.0
    %562 = vmatpush.msra.mxu0 0.0
    %563 = vmatpush.msra.mxu0 0.0
    %564 = vmatpush.msra.mxu0 0.0
    %565 = vmatpush.msra.mxu0 0.0
    %566 = vmatpush.msra.mxu0 0.0
    %567 = vmatpush.msra.mxu0 0.0
    %568 = vmatpush.msra.mxu0 %v95
    %569 = vmatpush.msra.mxu0 %v94
    %570 = vmatmul.f32.gmra.mxu0 %v549
    %v571 = vpop.f32.mrf.mxu0
    %v572 = vadd.f32 0.0, %v571
    %573 = vmatmul.f32.gmra.mxu0 %v552
    %v574 = vpop.f32.mrf.mxu0
    %v575 = vadd.f32 0.0, %v574
    %576 = vdwg.mxu0
    %v577 = vadd.f32 %v411, %v572
    %v578 = vadd.f32 %v414, %v575
    %579 = vrot.lane.b32.xlu0 %v62, 80
    %v580 = vpop.permute.xlu0 %579
    %581 = vrot.lane.b32.xlu0 %v62, 16
    %v582 = vpop.permute.xlu0 %581
    %v583 = vsel %vm101, %v580, 0
    %v585 = vsel %vm101, %v582, 0
    %587 = vmatpush.xpose.msra.mxu0 0.0
    %588 = vmatpush.xpose.msra.mxu0 0.0
    %589 = vmatpush.xpose.msra.mxu0 0.0
    %590 = vmatpush.xpose.msra.mxu0 0.0
    %591 = vmatpush.xpose.msra.mxu0 0.0
    %592 = vmatpush.xpose.msra.mxu0 0.0
    %593 = vmatpush.xpose.msra.mxu0 0.0
    %594 = vmatpush.xpose.msra.mxu0 0.0
    %595 = vmatpush.xpose.msra.mxu0 0.0
    %596 = vmatpush.xpose.msra.mxu0 0.0
    %597 = vmatpush.xpose.msra.mxu0 0.0
    %598 = vmatpush.xpose.msra.mxu0 0.0
    %599 = vmatpush.xpose.msra.mxu0 0.0
    %600 = vmatpush.xpose.msra.mxu0 0.0
    %601 = vmatpush.xpose.msra.mxu0 0.0
    %602 = vmatpush.xpose.msra.mxu0 %v585
    %603 = vmatmul.f32.gmra.mxu0 %v583
    %v604 = vpop.f32.mrf.mxu0
    %v605 = vadd.f32 0.0, %v604
    %606 = vdwg.mxu0
    %607 = vrot.lane.b32.xlu0 %v65, 80
    %v608 = vpop.permute.xlu0 %607
    %609 = vrot.lane.b32.xlu0 %v65, 16
    %v610 = vpop.permute.xlu0 %609
    %v611 = vsel %vm101, %v608, 0
    %v613 = vsel %vm101, %v610, 0
    %615 = vmatpush.xpose.msra.mxu0 0.0
    %616 = vmatpush.xpose.msra.mxu0 0.0
    %617 = vmatpush.xpose.msra.mxu0 0.0
    %618 = vmatpush.xpose.msra.mxu0 0.0
    %619 = vmatpush.xpose.msra.mxu0 0.0
    %620 = vmatpush.xpose.msra.mxu0 0.0
    %621 = vmatpush.xpose.msra.mxu0 0.0
    %622 = vmatpush.xpose.msra.mxu0 0.0
    %623 = vmatpush.xpose.msra.mxu0 0.0
    %624 = vmatpush.xpose.msra.mxu0 0.0
    %625 = vmatpush.xpose.msra.mxu0 0.0
    %626 = vmatpush.xpose.msra.mxu0 0.0
    %627 = vmatpush.xpose.msra.mxu0 0.0
    %628 = vmatpush.xpose.msra.mxu0 0.0
    %629 = vmatpush.xpose.msra.mxu0 0.0
    %630 = vmatpush.xpose.msra.mxu0 %v613
    %631 = vmatmul.f32.gmra.mxu0 %v611
    %v632 = vpop.f32.mrf.mxu0
    %v633 = vadd.f32 0.0, %v632
    %634 = vdwg.mxu0
    %v635 = vmul.f32 %v605, 0.25
    %v636 = vmul.f32 %v633, 0.25
    %v637 = vsel %vm155, %v635, -inf
    %638 = vmax.xlane.f32.xlu0 %v637
    %v639 = vpop.xlane.xlu0 %638
    %v640 = vsel %vm155, %v636, -inf
    %641 = vmax.xlane.f32.xlu0 %v640
    %v642 = vpop.xlane.xlu0 %641
    %v643 = vsub.f32 %v635, %v639
    %v644 = vsub.f32 %v636, %v642
    %v645 = vmul.f32 %v643, 1.442695
    %v646 = vpow.pop %v645
    %v647 = vmul.f32 %v644, 1.442695
    %v648 = vpow.pop %v647
    %v649 = vsel %vm155, %v646, 0.0
    %650 = vadd.xlane.f32.xlu0 %v649
    %v651 = vpop.xlane.xlu0 %650
    %v652 = vsel %vm155, %v648, 0.0
    %653 = vadd.xlane.f32.xlu0 %v652
    %v654 = vpop.xlane.xlu0 %653
    %v655 = vrcp.pop %v651
    %v656 = vrcp.pop %v654
    %v657 = vmul.f32 %v646, %v655
    %v658 = vmul.f32 %v648, %v656
    %659 = vrot.lane.b32.xlu0 %v85, 80
    %v660 = vpop.permute.xlu0 %659
    %v663 = vsel %vm155, %v657, 0
    %665 = vmatpush.msra.mxu0 0.0
    %666 = vmatpush.msra.mxu0 0.0
    %667 = vmatpush.msra.mxu0 0.0
    %668 = vmatpush.msra.mxu0 0.0
    %669 = vmatpush.msra.mxu0 0.0
    %670 = vmatpush.msra.mxu0 0.0
    %671 = vmatpush.msra.mxu0 0.0
    %672 = vmatpush.msra.mxu0 0.0
    %673 = vmatpush.msra.mxu0 0.0
    %674 = vmatpush.msra.mxu0 0.0
    %675 = vmatpush.msra.mxu0 0.0
    %676 = vmatpush.msra.mxu0 0.0
    %677 = vmatpush.msra.mxu0 0.0
    %678 = vmatpush.msra.mxu0 0.0
    %679 = vmatpush.msra.mxu0 0.0
    %680 = vmatpush.msra.mxu0 %v660
    %681 = vmatmul.f32.gmra.mxu0 %v663
    %v682 = vpop.f32.mrf.mxu0
    %v683 = vadd.f32 0.0, %v682
    %684 = vdwg.mxu0
    %685 = vrot.lane.b32.xlu0 %v88, 80
    %v686 = vpop.permute.xlu0 %685
    %v689 = vsel %vm155, %v658, 0
    %691 = vmatpush.msra.mxu0 0.0
    %692 = vmatpush.msra.mxu0 0.0
    %693 = vmatpush.msra.mxu0 0.0
    %694 = vmatpush.msra.mxu0 0.0
    %695 = vmatpush.msra.mxu0 0.0
    %696 = vmatpush.msra.mxu0 0.0
    %697 = vmatpush.msra.mxu0 0.0
    %698 = vmatpush.msra.mxu0 0.0
    %699 = vmatpush.msra.mxu0 0.0
    %700 = vmatpush.msra.mxu0 0.0
    %701 = vmatpush.msra.mxu0 0.0
    %702 = vmatpush.msra.mxu0 0.0
    %703 = vmatpush.msra.mxu0 0.0
    %704 = vmatpush.msra.mxu0 0.0
    %705 = vmatpush.msra.mxu0 0.0
    %706 = vmatpush.msra.mxu0 %v686
    %707 = vmatmul.f32.gmra.mxu0 %v689
    %v708 = vpop.f32.mrf.mxu0
    %v709 = vadd.f32 0.0, %v708
    %710 = vdwg.mxu0
    %v712 = vsel %vm101, %v683, 0
    %v715 = vsel %vm101, %v709, 0
    %717 = vmatpush.msra.mxu0 0.0
    %718 = vmatpush.msra.mxu0 0.0
    %719 = vmatpush.msra.mxu0 0.0
    %720 = vmatpush.msra.mxu0 0.0
    %721 = vmatpush.msra.mxu0 0.0
    %722 = vmatpush.msra.mxu0 0.0
    %723 = vmatpush.msra.mxu0 0.0
    %724 = vmatpush.msra.mxu0 0.0
    %725 = vmatpush.msra.mxu0 0.0
    %726 = vmatpush.msra.mxu0 0.0
    %727 = vmatpush.msra.mxu0 0.0
    %728 = vmatpush.msra.mxu0 0.0
    %729 = vmatpush.msra.mxu0 0.0
    %730 = vmatpush.msra.mxu0 0.0
    %731 = vmatpush.msra.mxu0 %v97
    %732 = vmatpush.msra.mxu0 %v96
    %733 = vmatmul.f32.gmra.mxu0 %v712
    %v734 = vpop.f32.mrf.mxu0
    %v735 = vadd.f32 0.0, %v734
    %736 = vmatmul.f32.gmra.mxu0 %v715
    %v737 = vpop.f32.mrf.mxu0
    %v738 = vadd.f32 0.0, %v737
    %739 = vdwg.mxu0
    %v740 = vadd.f32 %v577, %v735
    %v741 = vadd.f32 %v578, %v738
    %v742 = vld [vmem:[%s4] sm:$0x1]
    %v744 = vperm.slane %v742, 0
    %v746 = vadd.f32 %v740, %v744
    %v747 = vadd.f32 %v741, %v744
    %748 = vst.msk [vmem:[#allocation2] sm:$0xff] %vm101, %v746
    %749 = vst.msk [vmem:[#allocation2 + $0x8] sm:$0xff] %vm101, %v747
    // Predicated region
    $region22: #{multi_attention_heads.1} parent=1 // pred_check
      _
    $region23: #{multi_attention_heads.1} parent=1 // pred_check_branch
      %751 = sbr.rel (0) target = $region25
    $region24: #{multi_attention_heads.1} parent=1 // pred_region
      %753 = vsyncadd [#allocation3], 0
      %s754 = sshll.u32 [#allocation2], 4
      %s755 = int_to_ptr.vmem [resolvable:$true] %s754
      %s756 = sshll.u32 %s5, 4
      %s757 = int_to_ptr.hbm [resolvable:$true] %s756
      %762 = dma.vmem_to_hbm [thread:$0]  %s755, 256, %s757, [#allocation3], 128, 128, 8
    $region25: #{multi_attention_heads.1} parent=1 // pred_fallthru
      _
    // Predicated region
    $region26: #{multi_attention_heads.1} parent=1 // pred_check
      _
    $region27: #{multi_attention_heads.1} parent=1 // pred_check_branch
      %764 = sbr.rel (0) target = $region29
    $region28: #{multi_attention_heads.1} parent=1 // pred_region
      %766 = dma.done [#allocation3], 256
    $region29: #{multi_attention_heads.1} parent=1 // pred_fallthru
      _
    %767 = vsyncpa [#allocation3], 1

</llo_original>
